<compile_context>
chip_gen: v7x
topology: tpu7x:2x2x1
jax: 0.10.0
libtpu: 0.0.40
codegen_flags: <defaults>
</compile_context>

<pallas_src>
import jax
import jax.numpy as jnp
from jax.experimental import pallas as pl
from jax.experimental.pallas import tpu as pltpu


def _pe_add_kernel(x_ref, p_ref, o_ref):
    # x_ref: (bb, bl), p_ref: (1, bl) -> broadcast add over the batch rows.
    o_ref[...] = x_ref[...] + p_ref[...].astype(x_ref.dtype)


def make_positional_table(num_hiddens, max_len=1000, dtype=jnp.float32):
    """Precompute P exactly like PositionalEncoding.__init__ (num_hiddens must be even)."""
    pos = jnp.arange(max_len, dtype=jnp.float32)[:, None]                      # (max_len, 1)
    inv = jnp.power(
        10000.0, jnp.arange(0, num_hiddens, 2, dtype=jnp.float32) / num_hiddens
    )                                                                          # (H//2,)
    ang = pos / inv                                                            # (max_len, H//2)
    p = jnp.zeros((max_len, num_hiddens), dtype=jnp.float32)
    p = p.at[:, 0::2].set(jnp.sin(ang))
    p = p.at[:, 1::2].set(jnp.cos(ang))
    return p.astype(dtype)


def positional_encoding(x, p_table):
    """Forward of PositionalEncoding in eval mode: x + P[:, :T, :] (dropout = identity)."""
    B, T, H = x.shape
    p = p_table[:T]                      # static slice, (T, H)

    # Flatten (T, H) so the kernel's last dim is lane-dense (multiple of 128 for
    # typical T*H, or equal to the full dim which is always legal).
    L = T * H
    x2 = x.reshape(B, L)
    p2 = p.reshape(1, L).astype(jnp.float32)

    # Block sizes: amortize per-step overhead, stay small enough that the
    # double-buffered blocks fit comfortably in VMEM on v5e/v6e/v7x.
    bb = B if B <= 8 else 8              # == B (full dim) or a multiple of 8
    bl = L if L <= 32768 else 32768      # == L (full dim) or a multiple of 128

    grid = (pl.cdiv(B, bb), pl.cdiv(L, bl))

    out = pl.pallas_call(
        _pe_add_kernel,
        out_shape=jax.ShapeDtypeStruct((B, L), x.dtype),
        grid_spec=pl.GridSpec(
            grid=grid,
            in_specs=[
                pl.BlockSpec((bb, bl), lambda i, j: (i, j)),   # X block
                pl.BlockSpec((1, bl), lambda i, j: (0, j)),    # P block (broadcast over batch)
            ],
            out_specs=pl.BlockSpec((bb, bl), lambda i, j: (i, j)),
        ),
        compiler_params=pltpu.CompilerParams(
            dimension_semantics=("parallel", "parallel"),
        ),
    )(x2, p2)

    return out.reshape(B, T, H)


def _reference(x, p_table):
    """Pure-JAX reference mirroring the PyTorch module (eval mode)."""
    T = x.shape[1]
    return x + p_table[:T][None, :, :]


if __name__ == "__main__":
    key = jax.random.PRNGKey(0)

    B, T, H = 2, 8, 32                   # batch=2, seq=8, hidden=32
    max_len = 1000                       # module default

    x = jax.random.normal(key, (B, T, H), dtype=jnp.float32)
    p_table = make_positional_table(H, max_len=max_len)

    out = jax.block_until_ready(positional_encoding(x, p_table))
    ref = _reference(x, p_table)

    assert out.shape == (B, T, H)
    assert jnp.allclose(out, ref, atol=1e-6, rtol=1e-6), "mismatch vs reference"

    # also exercise a longer sequence to hit a multi-step grid
    T2 = 64
    x2 = jax.random.normal(jax.random.PRNGKey(1), (B, T2, H), dtype=jnp.float32)
    out2 = jax.block_until_ready(positional_encoding(x2, p_table))
    ref2 = _reference(x2, p_table)
    assert jnp.allclose(out2, ref2, atol=1e-6, rtol=1e-6), "mismatch vs reference (T=64)"

    print("KERNEL_OK")
</pallas_src>

<mosaic_0001>
module attributes {stable_mosaic.version = 11 : i64} {
  func.func @_pe_add_kernel(%arg0: i32, %arg1: i32, %arg2: memref<2x256xf32, #tpu.memory_space<vmem>>, %arg3: memref<1x256xf32, #tpu.memory_space<vmem>>, %arg4: memref<2x256xf32, #tpu.memory_space<vmem>>) attributes {dimension_semantics = [#tpu.dimension_semantics<parallel>, #tpu.dimension_semantics<parallel>], iteration_bounds = array<i64: 1, 1>, scalar_prefetch = 0 : i64, scratch_operands = 0 : i64, tpu.core_type = #tpu.core_type<tc>, window_params = [{transform_indices = @transform_0, window_bounds = array<i64: 2, 256>}, {transform_indices = @transform_1, window_bounds = array<i64: 1, 256>}, {transform_indices = @transform_2, window_bounds = array<i64: 2, 256>}]} {
    %c0 = arith.constant 0 : index
    %c0_0 = arith.constant 0 : index
    %0 = vector.load %arg2[%c0, %c0_0] : memref<2x256xf32, #tpu.memory_space<vmem>>, vector<2x256xf32>
    %c0_1 = arith.constant 0 : index
    %c0_2 = arith.constant 0 : index
    %1 = vector.load %arg3[%c0_1, %c0_2] : memref<1x256xf32, #tpu.memory_space<vmem>>, vector<1x256xf32>
    %2 = vector.broadcast %1 : vector<1x256xf32> to vector<2x256xf32>
    %3 = arith.addf %0, %2 : vector<2x256xf32>
    %c0_3 = arith.constant 0 : index
    %c0_4 = arith.constant 0 : index
    %4 = vector.load %arg4[%c0_3, %c0_4] : memref<2x256xf32, #tpu.memory_space<vmem>>, vector<2x256xf32>
    tpu.vector_store %arg4[%c0_3, %c0_4], %3 {strides = array<i32>} : memref<2x256xf32, #tpu.memory_space<vmem>>, vector<2x256xf32>,
    return
  }
  func.func @transform_0(%arg0: i32, %arg1: i32) -> (i32, i32) {
    %c0_i32 = arith.constant 0 : i32
    return %arg0, %arg1 : i32, i32
  }
  func.func @transform_1(%arg0: i32, %arg1: i32) -> (i32, i32) {
    %c0_i32 = arith.constant 0 : i32
    %c0_i32_0 = arith.constant 0 : i32
    return %c0_i32, %arg1 : i32, i32
  }
  func.func @transform_2(%arg0: i32, %arg1: i32) -> (i32, i32) {
    %c0_i32 = arith.constant 0 : i32
    return %arg0, %arg1 : i32, i32
  }
}

</mosaic_0001>

<llo_original>
// kernel: tpu_custom_call.1
$region0: #{tpu_custom_call.1}
  #allocation0 [shape = 'u32[]', space=smem, size = 0x4, offset = 0x4, fixed_abs, tag = 'smem constant byte address 0x4 - core index']
  #allocation1 [shape = 'u32[144,128]{1,0:T(1,128)}', space=vmem, size = 0x12000, scoped, tag = 'internal scratch']
  %s0 = inlined_call_operand.hbm [shape: f32[2,256], index: 0, kind: input, shape index: {}]
  %s1 = inlined_call_operand.vmem [shape: f32[1,256], index: 1, kind: input, shape index: {}]
  %s2 = inlined_call_operand.hbm [shape: f32[2,256], index: 2, kind: output, shape index: {}]
  %s3 = sld [smem:[#allocation0]]
  $region22: #{tpu_custom_call.1} parent=0
    _
  %s5 = ssub.s32 1, %s3
  %s6 = scalar_select 0, %s5, %s3
  $region1: #{tpu_custom_call.1} parent=0
    #allocation2 [shape = 'u8[2048]{0}', space=vmem, size = 0x800, scoped, tag = 'input window, operand 0, single buffered']
    #allocation3 [shape = 's32[1]{0}', space=sflag, size = 0x4, scoped, tag = 'scoped memory for tpu_custom_call.1']
    #allocation4 [shape = 's32[1]{0}', space=sflag, size = 0x4, scoped, tag = 'scoped memory for tpu_custom_call.1']
    #allocation5 [shape = 'u8[2048]{0}', space=vmem, size = 0x800, scoped, tag = 'output window, operand 0, single buffered']
    %7 = vsyncpa [#allocation3], 0
    %8 = vsyncpa [#allocation4], 0
    // Predicated region
    $region2: #{tpu_custom_call.1} parent=1 // pred_check
      _
    $region3: #{tpu_custom_call.1} parent=1 // pred_check_branch
      %10 = sbr.rel (0) target = $region5
    $region4: #{tpu_custom_call.1} parent=1 // pred_region
      %s12 = ssub.s32 64, 64
      %13 = vsyncadd [#allocation3], %s12
      %s15 = sshll.u32 [#allocation2], 4
      %s16 = int_to_ptr.vmem [resolvable:$true] %s15
      %18 = dma.hbm_to_vmem [thread:$0]  %s0, 64, %s16, [#allocation3]
    $region5: #{tpu_custom_call.1} parent=1 // pred_fallthru
      _
    // Predicated region
    $region6: #{tpu_custom_call.1} parent=1 // pred_check
      _
    $region7: #{tpu_custom_call.1} parent=1 // pred_check_branch
      %20 = sbr.rel (0) target = $region9
    $region8: #{tpu_custom_call.1} parent=1 // pred_region
      _
    $region9: #{tpu_custom_call.1} parent=1 // pred_fallthru
      _
    // Predicated region
    $region10: #{tpu_custom_call.1} parent=1 // pred_check
      _
    $region11: #{tpu_custom_call.1} parent=1 // pred_check_branch
      %22 = sbr.rel (0) target = $region13
    $region12: #{tpu_custom_call.1} parent=1 // pred_region
      %23 = dma.done [#allocation3], 64
    $region13: #{tpu_custom_call.1} parent=1 // pred_fallthru
      _
    %v24 = vld [vmem:[#allocation2] sm:$0xf]
    %v25 = vld [vmem:[%s1] sm:$0x3]
    %v27 = vlaneseq
    %v28 = vshrl.u32 %v27, 7
    %v29 = vsub.s32 0, %v28
    %v30 = vrot.slane %v25, %v29
    %v31 = vlaneseq
    %v32 = vshrl.u32 %v31, 7
    %v33 = vsub.s32 1, %v32
    %v34 = vrot.slane %v25, %v33
    %v35 = vcombine.low %v30, %v34
    %v37 = vunpack.c.l.s4 1983009808
    %v38 = vunpack.c.0.s8 %v37
    %v39 = vlaneseq
    %v40 = vshrl.u32 %v39, 7
    %v41 = vsub.s32 %v38, %v40
    %v42 = vrot.slane %v35, %v41
    %v44 = vadd.f32 %v24, %v42
    %45 = vst [vmem:[#allocation5] sm:$0xf] %v44
    // Predicated region
    $region14: #{tpu_custom_call.1} parent=1 // pred_check
      _
    $region15: #{tpu_custom_call.1} parent=1 // pred_check_branch
      %47 = sbr.rel (0) target = $region17
    $region16: #{tpu_custom_call.1} parent=1 // pred_region
      %s49 = ssub.s32 64, 64
      %50 = vsyncadd [#allocation4], %s49
      %s52 = sshll.u32 [#allocation5], 4
      %s53 = int_to_ptr.vmem [resolvable:$true] %s52
      %55 = dma.vmem_to_hbm [thread:$0]  %s53, 64, %s2, [#allocation4]
    $region17: #{tpu_custom_call.1} parent=1 // pred_fallthru
      _
    // Predicated region
    $region18: #{tpu_custom_call.1} parent=1 // pred_check
      _
    $region19: #{tpu_custom_call.1} parent=1 // pred_check_branch
      %57 = sbr.rel (0) target = $region21
    $region20: #{tpu_custom_call.1} parent=1 // pred_region
      %58 = dma.done [#allocation4], 64
    $region21: #{tpu_custom_call.1} parent=1 // pred_fallthru
      _
    %59 = vsyncpa [#allocation3], 1
    %60 = vsyncpa [#allocation4], 1

</llo_original>
